<compile_context>
chip_gen: v7x
topology: tpu7x:2x2x1
jax: 0.10.0
libtpu: 0.0.40
codegen_flags: <defaults>
</compile_context>

<pallas_src>
import functools

import jax
import jax.numpy as jnp
from jax.experimental import pallas as pl
from jax.experimental.pallas import tpu as pltpu


# ---------------------------------------------------------------------------
# Kernel body (shared by both paths).
#   wb_ref : (2,) f32 in SMEM  -> wb_ref[0] = weight, wb_ref[1] = bias
#   x_ref  : f32 tile in VMEM
#   o_ref  : f32 tile in VMEM (same shape as x_ref)
# ---------------------------------------------------------------------------
def _linear11_kernel(wb_ref, x_ref, o_ref):
    w = wb_ref[0]
    b = wb_ref[1]
    # torch.nn.Linear(1, 1) semantics: y = x * W + b  (pure VPU FMA, no MXU).
    o_ref[...] = x_ref[...] * w + b


def _ceil_div(a, b):
    return -(-a // b)


# ---------------------------------------------------------------------------
# Small-N path: single block, x kept in its native (N, 1) layout.
# Block shape equals the full array dims, so the (8,128) rule is satisfied and
# no wrapper reshape / relayout is needed at all.
# ---------------------------------------------------------------------------
def _linear_small(x, wb):
    n, _ = x.shape
    return pl.pallas_call(
        _linear11_kernel,
        out_shape=jax.ShapeDtypeStruct((n, 1), x.dtype),
        in_specs=[
            pl.BlockSpec(memory_space=pltpu.MemorySpace.SMEM),   # packed (w, b)
            pl.BlockSpec(memory_space=pltpu.MemorySpace.VMEM),   # x, whole array
        ],
        out_specs=pl.BlockSpec(memory_space=pltpu.MemorySpace.VMEM),
    )(wb, x)


# ---------------------------------------------------------------------------
# Large-N path: lane-dense (rows, 128) streaming grid, pipelined tiles.
# ---------------------------------------------------------------------------
_LANES = 128
_TILE_ROWS = 1024  # (1024, 128) f32 tile = 512 KiB; double-buffered in+out ~2 MiB


def _linear_tiled(x, wb):
    n, _ = x.shape
    dtype = x.dtype

    rows = _ceil_div(n, _LANES)
    block_rows = min(_TILE_ROWS, rows)
    block_rows = _ceil_div(block_rows, 8) * 8          # sublane multiple of 8
    rows_pad = _ceil_div(rows, block_rows) * block_rows
    n_pad = rows_pad * _LANES
    num_tiles = rows_pad // block_rows

    # Row-major flatten: same linear element order as the (N, 1) input.
    x_flat = x.reshape(-1)
    if n_pad != n:
        x_flat = jnp.pad(x_flat, (0, n_pad - n))
    x2d = x_flat.reshape(rows_pad, _LANES)

    y2d = pl.pallas_call(
        _linear11_kernel,
        out_shape=jax.ShapeDtypeStruct((rows_pad, _LANES), dtype),
        grid=(num_tiles,),
        in_specs=[
            pl.BlockSpec(memory_space=pltpu.MemorySpace.SMEM),        # packed (w, b)
            pl.BlockSpec((block_rows, _LANES), lambda i: (i, 0)),     # x tile
        ],
        out_specs=pl.BlockSpec((block_rows, _LANES), lambda i: (i, 0)),
        compiler_params=pltpu.CompilerParams(
            dimension_semantics=("parallel",),    # lets v7x split across its 2 TCs
        ),
    )(wb, x2d)

    return y2d.reshape(-1)[:n].reshape(n, 1)


# ---------------------------------------------------------------------------
# Public forward: Linear(1, 1).
# ---------------------------------------------------------------------------
_SMALL_N_THRESHOLD = 16 * 1024  # below: single-block path; above: tiled streaming path


@jax.jit
def linear_pallas(x, weight, bias):
    """x: (N, 1) f32; weight: (1, 1) f32; bias: (1,) f32 -> (N, 1) f32."""
    n, in_f = x.shape
    assert in_f == 1 and weight.shape == (1, 1) and bias.shape == (1,), (
        "kernel specialized for Linear(1, 1)")

    # Pack weight and bias into one (2,) SMEM operand (one scalar transfer).
    wb = jnp.concatenate([weight.reshape(-1), bias.reshape(-1)]).astype(x.dtype)

    if n <= _SMALL_N_THRESHOLD:
        return _linear_small(x, wb)
    return _linear_tiled(x, wb)


if __name__ == "__main__":
    key = jax.random.PRNGKey(0)
    kx, kw, kb = jax.random.split(key, 3)

    # Batch of 8 scalar inputs, consistent with Linear(1, 1).
    x = jax.random.normal(kx, (8, 1), dtype=jnp.float32)

    # Deterministic parameter init mimicking torch.nn.Linear default:
    # uniform(-1/sqrt(fan_in), 1/sqrt(fan_in)) with fan_in = 1.
    bound = 1.0
    weight = jax.random.uniform(kw, (1, 1), dtype=jnp.float32,
                                minval=-bound, maxval=bound)
    bias = jax.random.uniform(kb, (1,), dtype=jnp.float32,
                              minval=-bound, maxval=bound)

    # Small-N (single-block, native-layout) Pallas path.
    y = linear_pallas(x, weight, bias)
    jax.block_until_ready(y)
    y_ref = x @ weight.T + bias
    assert y.shape == y_ref.shape
    assert jnp.allclose(y, y_ref, atol=1e-5, rtol=1e-5), "small-N mismatch vs reference"

    # Large-N (lane-dense tiled, pipelined) Pallas path.
    x_big = jax.random.normal(kx, (128 * 4096, 1), dtype=jnp.float32)  # 524288 rows
    y_big = linear_pallas(x_big, weight, bias)
    jax.block_until_ready(y_big)
    y_big_ref = x_big * weight[0, 0] + bias[0]
    assert jnp.allclose(y_big, y_big_ref, atol=1e-5, rtol=1e-5), "tiled mismatch vs reference"

    print("KERNEL_OK")
</pallas_src>

<mosaic_0001>
module attributes {stable_mosaic.version = 11 : i64} {
  func.func @_linear11_kernel(%arg0: memref<2xf32, #tpu.memory_space<smem>>, %arg1: memref<8x1xf32, #tpu.memory_space<vmem>>, %arg2: memref<8x1xf32, #tpu.memory_space<vmem>>) attributes {dimension_semantics = [], scalar_prefetch = 0 : i64, scratch_operands = 0 : i64, tpu.core_type = #tpu.core_type<tc>} {
    %c0 = arith.constant 0 : index
    %0 = memref.load %arg0[%c0] : memref<2xf32, #tpu.memory_space<smem>>
    %c1 = arith.constant 1 : index
    %1 = memref.load %arg0[%c1] : memref<2xf32, #tpu.memory_space<smem>>
    %c0_0 = arith.constant 0 : index
    %c0_1 = arith.constant 0 : index
    %2 = vector.load %arg1[%c0_0, %c0_1] : memref<8x1xf32, #tpu.memory_space<vmem>>, vector<8x1xf32>
    %3 = vector.broadcast %0 : f32 to vector<8x1xf32>
    %4 = arith.mulf %2, %3 : vector<8x1xf32>
    %5 = vector.broadcast %1 : f32 to vector<8x1xf32>
    %6 = arith.addf %4, %5 : vector<8x1xf32>
    %c0_2 = arith.constant 0 : index
    %c0_3 = arith.constant 0 : index
    %7 = vector.load %arg2[%c0_2, %c0_3] : memref<8x1xf32, #tpu.memory_space<vmem>>, vector<8x1xf32>
    tpu.vector_store %arg2[%c0_2, %c0_3], %6 {strides = array<i32>} : memref<8x1xf32, #tpu.memory_space<vmem>>, vector<8x1xf32>,
    return
  }
}

</mosaic_0001>

<llo_original>
// kernel: linear_pallas.1
$region0: #{linear_pallas.1}
  #allocation0 [shape = 'u32[]', space=smem, size = 0x4, offset = 0x4, fixed_abs, tag = 'smem constant byte address 0x4 - core index']
  #allocation1 [shape = 'u32[144,128]{1,0:T(1,128)}', space=vmem, size = 0x12000, scoped, tag = 'internal scratch']
  %s0 = inlined_call_operand.vmem [shape: f32[2], index: 0, kind: input, shape index: {}]
  %s1 = inlined_call_operand.vmem [shape: f32[8,1], index: 1, kind: input, shape index: {}]
  %s2 = inlined_call_operand.vmem [shape: f32[8,1], index: 2, kind: output, shape index: {}]
  %s3 = sld [smem:[#allocation0]]
  $region22: #{linear_pallas.1} parent=0
    _
  %s5 = ssub.s32 1, %s3
  %s6 = scalar_select 0, %s5, %s3
  $region1: #{linear_pallas.1} parent=0
    #allocation2 [shape = 'u8[512]{0}', space=smem, size = 0x200, scoped, tag = 'input window, operand 0, single buffered']
    #allocation3 [shape = 's32[1]{0}', space=sflag, size = 0x4, scoped, tag = 'scoped memory for linear_pallas.1']
    %7 = vsyncpa [#allocation3], 0
    // Predicated region
    $region2: #{linear_pallas.1} parent=1 // pred_check
      _
    $region3: #{linear_pallas.1} parent=1 // pred_check_branch
      %9 = sbr.rel (0) target = $region5
    $region4: #{linear_pallas.1} parent=1 // pred_region
      %s11 = ssub.s32 16, 16
      %12 = vsyncadd [#allocation3], %s11
      %s14 = sshll.u32 %s0, 4
      %s15 = int_to_ptr.vmem [resolvable:$true] %s14
      %17 = dma.vmem_to_smem %s15, 16, [#allocation2], [#allocation3]
    $region5: #{linear_pallas.1} parent=1 // pred_fallthru
      _
    // Predicated region
    $region6: #{linear_pallas.1} parent=1 // pred_check
      _
    $region7: #{linear_pallas.1} parent=1 // pred_check_branch
      %19 = sbr.rel (0) target = $region9
    $region8: #{linear_pallas.1} parent=1 // pred_region
      _
    $region9: #{linear_pallas.1} parent=1 // pred_fallthru
      _
    // Predicated region
    $region10: #{linear_pallas.1} parent=1 // pred_check
      _
    $region11: #{linear_pallas.1} parent=1 // pred_check_branch
      %21 = sbr.rel (0) target = $region13
    $region12: #{linear_pallas.1} parent=1 // pred_region
      %22 = dma.done [#allocation3], 16
    $region13: #{linear_pallas.1} parent=1 // pred_fallthru
      _
    %23 = sfence
    %s24 = sld [smem:[#allocation2]]
    %s25 = sld [smem:[#allocation2 + $0x1]]
    %v26 = vld [vmem:[%s1] sm:$0xff]
    %v27 = vstv %s24
    %v28 = vmul.f32 %v26, %v27
    %v29 = vstv %s25
    %v30 = vadd.f32 %v28, %v29
    %vm31 = vcmask 7168
    %32 = vst.msk [vmem:[%s2] sm:$0xff] %vm31, %v30
    // Predicated region
    $region14: #{linear_pallas.1} parent=1 // pred_check
      _
    $region15: #{linear_pallas.1} parent=1 // pred_check_branch
      %34 = sbr.rel (0) target = $region17
    $region16: #{linear_pallas.1} parent=1 // pred_region
      _
    $region17: #{linear_pallas.1} parent=1 // pred_fallthru
      _
    // Predicated region
    $region18: #{linear_pallas.1} parent=1 // pred_check
      _
    $region19: #{linear_pallas.1} parent=1 // pred_check_branch
      %36 = sbr.rel (0) target = $region21
    $region20: #{linear_pallas.1} parent=1 // pred_region
      _
    $region21: #{linear_pallas.1} parent=1 // pred_fallthru
      _
    %37 = vsyncpa [#allocation3], 1

</llo_original>
